<compile_context>
chip_gen: v6e
topology: v6e:2x2x1
jax: 0.10.0
libtpu: 0.0.40
codegen_flags: <defaults>
</compile_context>

<pallas_src>
import jax
import jax.numpy as jnp
from jax.experimental import pallas as pl
from jax.experimental.pallas import tpu as pltpu


def _masked_sum_pool_kernel(x_ref, o_ref, acc_ref):
    # x_ref:   (TB, TL, Dp) input tile in VMEM
    # o_ref:   (TB, Dp) output tile (resident across the L grid axis)
    # acc_ref: (TB, Dp) float32 accumulator scratch
    @pl.when(pl.program_id(1) == 0)
    def _init():
        acc_ref[...] = jnp.zeros_like(acc_ref)

    # Accumulate in f32 regardless of input dtype (bit-stable across L tilings,
    # matches a f32-accumulated reference for bf16 inputs). VPU adds hide under DMA.
    acc_ref[...] += jnp.sum(x_ref[...].astype(jnp.float32), axis=1)

    @pl.when(pl.program_id(1) == pl.num_programs(1) - 1)
    def _finalize():
        o_ref[...] = acc_ref[...].astype(o_ref.dtype)


def _round_up(x, m):
    return ((x + m - 1) // m) * m


def masked_sum_pooling(embedding_matrix: jax.Array) -> jax.Array:
    """Sum-pool over the sequence dimension (dim=1) of a [B, L, D] tensor."""
    B, L, D = embedding_matrix.shape
    dtype = embedding_matrix.dtype
    itemsize = jnp.dtype(dtype).itemsize
    # Sublane granularity for the block's second-to-last dim (packed dtypes pack
    # along sublanes).
    sub = {4: 8, 2: 16, 1: 32}.get(itemsize, 8)

    # Lane-dense hidden dim (multiple of 128) so output stores are unmasked vst.
    Dp = _round_up(D, 128)

    # Batch tile: small (8) so the accumulator stays tiny and the batch grid axis
    # has many parallel steps for megacore sharding.
    TB = 8

    # L tile: as large as a ~4 MiB input block allows (double-buffered ≈ 8 MiB,
    # safely under the scoped-VMEM defaults on v5e/v6e/v7x), multiple of `sub`.
    target_block_bytes = 4 * 1024 * 1024
    max_tl = max(sub, (target_block_bytes // (TB * Dp * itemsize)) // sub * sub)
    TL = min(_round_up(L, sub), max_tl)

    # Pad so tiles divide the array evenly; zero padding does not affect the sum.
    Bp = _round_up(B, TB)
    Lp = _round_up(L, TL)

    x = embedding_matrix
    if (Bp, Lp, Dp) != (B, L, D):
        x = jnp.pad(x, ((0, Bp - B), (0, Lp - L), (0, Dp - D)))

    grid = (Bp // TB, Lp // TL)

    out = pl.pallas_call(
        _masked_sum_pool_kernel,
        out_shape=jax.ShapeDtypeStruct((Bp, Dp), dtype),
        grid_spec=pltpu.PrefetchScalarGridSpec(
            num_scalar_prefetch=0,
            grid=grid,
            in_specs=[pl.BlockSpec((TB, TL, Dp), lambda i, l: (i, l, 0))],
            out_specs=pl.BlockSpec((TB, Dp), lambda i, l: (i, 0)),
            scratch_shapes=[pltpu.VMEM((TB, Dp), jnp.float32)],
        ),
        compiler_params=pltpu.CompilerParams(
            dimension_semantics=("parallel", "arbitrary"),
            vmem_limit_bytes=64 * 1024 * 1024,
        ),
        cost_estimate=pl.CostEstimate(
            flops=Bp * Lp * Dp,
            transcendentals=0,
            bytes_accessed=Bp * Lp * Dp * itemsize + Bp * Dp * itemsize,
        ),
    )(x)

    if (Bp, Dp) != (B, D):
        out = out[:B, :D]
    return out


if __name__ == "__main__":
    key = jax.random.PRNGKey(0)
    B, L, D = 2, 8, 32  # batch, seq, hidden (small shapes consistent with the module)
    x = jax.random.normal(key, (B, L, D), dtype=jnp.float32)

    out = masked_sum_pooling(x)
    jax.block_until_ready(out)

    # Sanity check vs plain-JAX reference (same semantics as torch.sum(x, dim=1)).
    ref = jnp.sum(x, axis=1)
    assert out.shape == (B, D)
    assert jnp.allclose(out, ref, atol=1e-5, rtol=1e-5)

    # Extra check on a shape that exercises real tiling (multiple L tiles, bf16).
    key2 = jax.random.PRNGKey(1)
    x2 = jax.random.normal(key2, (17, 300, 256), dtype=jnp.bfloat16)
    out2 = masked_sum_pooling(x2)
    jax.block_until_ready(out2)
    ref2 = jnp.sum(x2.astype(jnp.float32), axis=1).astype(jnp.bfloat16)
    assert out2.shape == (17, 256)
    assert jnp.allclose(out2.astype(jnp.float32), ref2.astype(jnp.float32),
                        atol=1e-1, rtol=1e-2)

    print("KERNEL_OK")
</pallas_src>

<mosaic_0001>
module attributes {stable_mosaic.version = 11 : i64} {
  func.func @_masked_sum_pool_kernel(%arg0: i32, %arg1: i32, %arg2: memref<8x8x128xf32, #tpu.memory_space<vmem>>, %arg3: memref<8x128xf32, #tpu.memory_space<vmem>>, %arg4: memref<8x128xf32, #tpu.memory_space<vmem>>) attributes {dimension_semantics = [#tpu.dimension_semantics<parallel>, #tpu.dimension_semantics<arbitrary>], iteration_bounds = array<i64: 1, 1>, scalar_prefetch = 0 : i64, scratch_operands = 1 : i64, tpu.core_type = #tpu.core_type<tc>, window_params = [{transform_indices = @transform_0, window_bounds = array<i64: 8, 8, 128>}, {transform_indices = @transform_1, window_bounds = array<i64: 8, 128>}]} {
    %c0_i32 = arith.constant 0 : i32
    %0 = arith.cmpi eq, %arg1, %c0_i32 : i32
    %1 = arith.extui %0 : i1 to i32
    %c0_i32_0 = arith.constant 0 : i32
    %2 = arith.cmpi ne, %1, %c0_i32_0 : i32
    scf.if %2 {
      %cst_9 = arith.constant 0.000000e+00 : f32
      %11 = vector.broadcast %cst_9 : f32 to vector<8x128xf32>
      %c0_10 = arith.constant 0 : index
      %c0_11 = arith.constant 0 : index
      %12 = vector.load %arg4[%c0_10, %c0_11] : memref<8x128xf32, #tpu.memory_space<vmem>>, vector<8x128xf32>
      tpu.vector_store %arg4[%c0_10, %c0_11], %11 {strides = array<i32>} : memref<8x128xf32, #tpu.memory_space<vmem>>, vector<8x128xf32>,
    } else {
    }
    %c0 = arith.constant 0 : index
    %c0_1 = arith.constant 0 : index
    %3 = vector.load %arg4[%c0, %c0_1] : memref<8x128xf32, #tpu.memory_space<vmem>>, vector<8x128xf32>
    %c0_2 = arith.constant 0 : index
    %c0_3 = arith.constant 0 : index
    %c0_4 = arith.constant 0 : index
    %4 = vector.load %arg2[%c0_2, %c0_3, %c0_4] : memref<8x8x128xf32, #tpu.memory_space<vmem>>, vector<8x8x128xf32>
    %cst = arith.constant dense<0.000000e+00> : vector<8x128xf32>
    %5 = vector.multi_reduction <add>, %4, %cst [1] : vector<8x8x128xf32> to vector<8x128xf32>
    %6 = arith.addf %3, %5 : vector<8x128xf32>
    %c0_5 = arith.constant 0 : index
    %c0_6 = arith.constant 0 : index
    %7 = vector.load %arg4[%c0_5, %c0_6] : memref<8x128xf32, #tpu.memory_space<vmem>>, vector<8x128xf32>
    tpu.vector_store %arg4[%c0_5, %c0_6], %6 {strides = array<i32>} : memref<8x128xf32, #tpu.memory_space<vmem>>, vector<8x128xf32>,
    %c0_i32_7 = arith.constant 0 : i32
    %8 = arith.cmpi eq, %arg1, %c0_i32_7 : i32
    %9 = arith.extui %8 : i1 to i32
    %c0_i32_8 = arith.constant 0 : i32
    %10 = arith.cmpi ne, %9, %c0_i32_8 : i32
    scf.if %10 {
      %c0_9 = arith.constant 0 : index
      %c0_10 = arith.constant 0 : index
      %11 = vector.load %arg4[%c0_9, %c0_10] : memref<8x128xf32, #tpu.memory_space<vmem>>, vector<8x128xf32>
      %c0_11 = arith.constant 0 : index
      %c0_12 = arith.constant 0 : index
      %12 = vector.load %arg3[%c0_11, %c0_12] : memref<8x128xf32, #tpu.memory_space<vmem>>, vector<8x128xf32>
      tpu.vector_store %arg3[%c0_11, %c0_12], %11 {strides = array<i32>} : memref<8x128xf32, #tpu.memory_space<vmem>>, vector<8x128xf32>,
    } else {
    }
    return
  }
  func.func @transform_0(%arg0: i32, %arg1: i32) -> (i32, i32, i32) {
    %c0_i32 = arith.constant 0 : i32
    %c0_i32_0 = arith.constant 0 : i32
    return %arg0, %arg1, %c0_i32 : i32, i32, i32
  }
  func.func @transform_1(%arg0: i32, %arg1: i32) -> (i32, i32) {
    %c0_i32 = arith.constant 0 : i32
    %c0_i32_0 = arith.constant 0 : i32
    return %arg0, %c0_i32 : i32, i32
  }
}

</mosaic_0001>

<llo_original>
// kernel: tpu_custom_call.1
$region0: #{tpu_custom_call.1}
  #allocation0 [shape = 'u32[]', space=smem, size = 0x4, offset = 0x4, fixed_abs, tag = 'smem constant byte address 0x4 - core index']
  #allocation1 [shape = 'u32[144,128]{1,0:T(1,128)}', space=vmem, size = 0x12000, scoped, tag = 'internal scratch']
  #allocation2 [shape = 'f32[8,128]{1,0:T(8,128)}', space=vmem, size = 0x1000, scoped, tag = 'scratch operand']
  %s0 = inlined_call_operand.hbm [shape: f32[8,8,128], index: 0, kind: input, shape index: {}]
  %s1 = inlined_call_operand.hbm [shape: f32[8,128], index: 1, kind: output, shape index: {}]
  %s2 = sld [smem:[#allocation0]]
  $region26: #{tpu_custom_call.1} parent=0
    _
  %s4 = ssub.s32 1, %s2
  %s5 = scalar_select 0, %s4, %s2
  $region1: #{tpu_custom_call.1} parent=0
    #allocation3 [shape = 'u8[32768]{0}', space=vmem, size = 0x8000, scoped, tag = 'input window, operand 0, single buffered']
    #allocation4 [shape = 's32[1]{0}', space=sflag, size = 0x4, scoped, tag = 'scoped memory for tpu_custom_call.1']
    #allocation5 [shape = 's32[1]{0}', space=sflag, size = 0x4, scoped, tag = 'scoped memory for tpu_custom_call.1']
    #allocation6 [shape = 'u8[4096]{0}', space=vmem, size = 0x1000, scoped, tag = 'output window, operand 0, single buffered']
    %6 = vsyncpa [#allocation4], 0
    %7 = vsyncpa [#allocation5], 0
    // Predicated region
    $region2: #{tpu_custom_call.1} parent=1 // pred_check
      _
    $region3: #{tpu_custom_call.1} parent=1 // pred_check_branch
      %9 = sbr.rel (0) target = $region5
    $region4: #{tpu_custom_call.1} parent=1 // pred_region
      %s11 = ssub.s32 1024, 1024
      %12 = vsyncadd [#allocation4], %s11
      %s13 = sshll.u32 [#allocation3], 4
      %s14 = int_to_ptr.vmem [resolvable:$true] %s13
      %19 = dma.hbm_to_vmem [thread:$0]  %s0, 1024, %s14, [#allocation4], 128, 128, 8
    $region5: #{tpu_custom_call.1} parent=1 // pred_fallthru
      _
    // Predicated region
    $region6: #{tpu_custom_call.1} parent=1 // pred_check
      _
    $region7: #{tpu_custom_call.1} parent=1 // pred_check_branch
      %21 = sbr.rel (0) target = $region9
    $region8: #{tpu_custom_call.1} parent=1 // pred_region
      %22 = dma.done [#allocation4], 1024
    $region9: #{tpu_custom_call.1} parent=1 // pred_fallthru
      _
    %p23 = scmp.eq.s32.totalorder 0, 0
    // Predicated region
    $region10: #{tpu_custom_call.1} parent=1 // pred_check
      %p24 = pneg %p23
    $region11: #{tpu_custom_call.1} parent=1 // pred_check_branch
      %26 = sbr.rel (%p24) target = $region13
    $region12: #{tpu_custom_call.1} parent=1 // pred_region
      %27 = vst [vmem:[#allocation2] sm:$0xff] 0.0
    $region13: #{tpu_custom_call.1} parent=1 // pred_fallthru
      _
    %v28 = vld [vmem:[#allocation2] sm:$0xff]
    %v29 = vld [vmem:[#allocation3] sm:$0xff]
    %v30 = vld [vmem:[#allocation3 + $0x8] sm:$0xff]
    %v31 = vld [vmem:[#allocation3 + $0x10] sm:$0xff]
    %v32 = vld [vmem:[#allocation3 + $0x18] sm:$0xff]
    %v33 = vld [vmem:[#allocation3 + $0x20] sm:$0xff]
    %v34 = vld [vmem:[#allocation3 + $0x28] sm:$0xff]
    %v35 = vld [vmem:[#allocation3 + $0x30] sm:$0xff]
    %v36 = vld [vmem:[#allocation3 + $0x38] sm:$0xff]
    %v37 = vrot.slane %v29, 4
    %v38 = vadd.f32 %v29, %v37
    %v39 = vrot.slane %v38, 2
    %v40 = vadd.f32 %v38, %v39
    %v41 = vrot.slane %v40, 1
    %v42 = vadd.f32 %v40, %v41
    %v43 = vrot.slane %v30, 4
    %v44 = vadd.f32 %v30, %v43
    %v45 = vrot.slane %v44, 2
    %v46 = vadd.f32 %v44, %v45
    %v47 = vrot.slane %v46, 1
    %v48 = vadd.f32 %v46, %v47
    %v49 = vrot.slane %v31, 4
    %v50 = vadd.f32 %v31, %v49
    %v51 = vrot.slane %v50, 2
    %v52 = vadd.f32 %v50, %v51
    %v53 = vrot.slane %v52, 1
    %v54 = vadd.f32 %v52, %v53
    %v55 = vrot.slane %v32, 4
    %v56 = vadd.f32 %v32, %v55
    %v57 = vrot.slane %v56, 2
    %v58 = vadd.f32 %v56, %v57
    %v59 = vrot.slane %v58, 1
    %v60 = vadd.f32 %v58, %v59
    %v61 = vrot.slane %v33, 4
    %v62 = vadd.f32 %v33, %v61
    %v63 = vrot.slane %v62, 2
    %v64 = vadd.f32 %v62, %v63
    %v65 = vrot.slane %v64, 1
    %v66 = vadd.f32 %v64, %v65
    %v67 = vrot.slane %v34, 4
    %v68 = vadd.f32 %v34, %v67
    %v69 = vrot.slane %v68, 2
    %v70 = vadd.f32 %v68, %v69
    %v71 = vrot.slane %v70, 1
    %v72 = vadd.f32 %v70, %v71
    %v73 = vrot.slane %v35, 4
    %v74 = vadd.f32 %v35, %v73
    %v75 = vrot.slane %v74, 2
    %v76 = vadd.f32 %v74, %v75
    %v77 = vrot.slane %v76, 1
    %v78 = vadd.f32 %v76, %v77
    %v79 = vrot.slane %v36, 4
    %v80 = vadd.f32 %v36, %v79
    %v81 = vrot.slane %v80, 2
    %v82 = vadd.f32 %v80, %v81
    %v83 = vrot.slane %v82, 1
    %v84 = vadd.f32 %v82, %v83
    %vm93 = vcmask 1041409
    %v94 = vsel %vm93, %v48, %v42
    %vm95 = vcmask 1042434
    %v96 = vsel %vm95, %v54, %v94
    %vm97 = vcmask 1043459
    %v98 = vsel %vm97, %v60, %v96
    %vm99 = vcmask 1044484
    %v100 = vsel %vm99, %v66, %v98
    %vm101 = vcmask 1045509
    %v102 = vsel %vm101, %v72, %v100
    %vm103 = vcmask 1046534
    %v104 = vsel %vm103, %v78, %v102
    %vm105 = vcmask 1047559
    %v106 = vsel %vm105, %v84, %v104
    %v108 = vadd.f32 %v28, %v106
    %109 = vst [vmem:[#allocation2] sm:$0xff] %v108
    // Predicated region
    $region14: #{tpu_custom_call.1} parent=1 // pred_check
      %p110 = pneg %p23
    $region15: #{tpu_custom_call.1} parent=1 // pred_check_branch
      %112 = sbr.rel (%p110) target = $region17
    $region16: #{tpu_custom_call.1} parent=1 // pred_region
      %v113 = vld [vmem:[#allocation2] sm:$0xff]
      %114 = vst [vmem:[#allocation6] sm:$0xff] %v113
    $region17: #{tpu_custom_call.1} parent=1 // pred_fallthru
      _
    // Predicated region
    $region18: #{tpu_custom_call.1} parent=1 // pred_check
      _
    $region19: #{tpu_custom_call.1} parent=1 // pred_check_branch
      %116 = sbr.rel (0) target = $region21
    $region20: #{tpu_custom_call.1} parent=1 // pred_region
      %s118 = ssub.s32 128, 128
      %119 = vsyncadd [#allocation5], %s118
      %s121 = sshll.u32 [#allocation6], 4
      %s122 = int_to_ptr.vmem [resolvable:$true] %s121
      %124 = dma.vmem_to_hbm [thread:$0]  %s122, 128, %s1, [#allocation5]
    $region21: #{tpu_custom_call.1} parent=1 // pred_fallthru
      _
    // Predicated region
    $region22: #{tpu_custom_call.1} parent=1 // pred_check
      _
    $region23: #{tpu_custom_call.1} parent=1 // pred_check_branch
      %126 = sbr.rel (0) target = $region25
    $region24: #{tpu_custom_call.1} parent=1 // pred_region
      %127 = dma.done [#allocation5], 128
    $region25: #{tpu_custom_call.1} parent=1 // pred_fallthru
      _
    %128 = vsyncpa [#allocation4], 1
    %129 = vsyncpa [#allocation5], 1

</llo_original>
